<compile_context>
chip_gen: v5e
topology: v5e:2x2
jax: 0.10.0
libtpu: 0.0.40
codegen_flags: <defaults>
</compile_context>

<pallas_src>
import functools
import numpy as np
import jax
import jax.numpy as jnp
from jax.experimental import pallas as pl
from jax.experimental.pallas import tpu as pltpu

_LANE = 128


def _gaussian_1d(scale):
    """1-D gaussian taps exactly as AntiAliasInterpolation2d builds them.

    torch builds outer(g, g) / sum(outer(g, g)); that factors exactly into
    outer(g / g.sum(), g / g.sum()), so the 2-D blur is separable.
    """
    sigma = (1.0 / scale - 1.0) / 2.0
    ksize = 2 * int(round(sigma * 4)) + 1
    ax = np.arange(ksize, dtype=np.float64)
    mean = (ksize - 1) / 2.0
    g = np.exp(-((ax - mean) ** 2) / (2.0 * sigma ** 2))
    return g / g.sum(), ksize


@functools.lru_cache(maxsize=None)
def _build_matrices(scale, H, W):
    """Fold zero-pad + gaussian blur + nearest ::step subsample into two
    per-channel matrices:  out[c] = Ah @ x[c] @ Aw  (exact; built in f64)."""
    inv = 1.0 / float(scale)
    step = int(round(inv))
    if abs(inv - step) > 1e-6:
        # TODO(synk): non-integer 1/scale needs torch's fractional nearest resample.
        raise NotImplementedError(f"scale {scale}: 1/scale must be an integer")
    g, ksize = _gaussian_1d(scale)
    ka = ksize // 2
    Hout, Wout = H // step, W // step          # == floor(H*scale), floor(W*scale)

    Ah = np.zeros((Hout, H), np.float64)
    for o in range(Hout):
        r = o * step
        for i in range(ksize):
            h = r + i - ka
            if 0 <= h < H:
                Ah[o, h] += g[i]

    Aw = np.zeros((W, Wout), np.float64)
    for o in range(Wout):
        c0 = o * step
        for j in range(ksize):
            w = c0 + j - ka
            if 0 <= w < W:
                Aw[w, o] += g[j]
    return Ah, Aw, Hout, Wout


def _pyramid_kernel(x_ref, aw_ref, *refs, num_scales, col_off, col_width):
    # x_ref  : (H, W)        one (batch, channel) image plane, native dtype
    # aw_ref : (W, Wtot)     per-scale column matrices concatenated (lane-padded)
    # refs   : [Ah_0, ..., Ah_{n-1}, out_0, ..., out_{n-1}]
    #   Ah_s  : (Hout_s, H)
    #   out_s : (Hout_s, Wpad_s)   lane-dense (multiple of 128)
    x = x_ref[...]                                             # keep input dtype
    # Single MXU pass of x against the fused column matrix (f32 accumulation).
    y_all = jnp.dot(x, aw_ref[...], preferred_element_type=jnp.float32)
    for s in range(num_scales):
        ah_ref = refs[s]
        out_ref = refs[num_scales + s]
        off, wid = col_off[s], col_width[s]
        y = y_all[:, off:off + wid]                            # 128-aligned static slice
        y = y.astype(ah_ref.dtype)                             # keep MXU in input dtype
        z = jnp.dot(ah_ref[...], y, preferred_element_type=jnp.float32)
        out_ref[...] = z.astype(out_ref.dtype)                 # unmasked lane-dense store


@functools.lru_cache(maxsize=None)
def _get_pyramid_fn(scales, B, C, H, W, dtype_name):
    """Build (and cache) a jitted fused pallas_call for the given signature."""
    dtype = jnp.dtype(dtype_name)

    ahs, aw_blocks = [], []
    col_off, col_width, out_dims = [], [], []
    off = 0
    for s in scales:
        Ah, Aw, Hout, Wout = _build_matrices(float(s), H, W)
        Wpad = -(-Wout // _LANE) * _LANE                       # lane-dense output width
        Aw_pad = np.zeros((W, Wpad), np.float64)
        Aw_pad[:, :Wout] = Aw
        ahs.append(jnp.asarray(Ah, dtype))
        aw_blocks.append(Aw_pad)
        col_off.append(off)
        col_width.append(Wpad)
        off += Wpad
        out_dims.append((Hout, Wout, Wpad))
    aw_all = jnp.asarray(np.concatenate(aw_blocks, axis=1), dtype)   # (W, Wtot)

    in_specs = [
        pl.BlockSpec((None, None, H, W), lambda b, c: (b, c, 0, 0)),  # x plane
        pl.BlockSpec(aw_all.shape, lambda b, c: (0, 0)),              # fused Aw (constant)
    ]
    in_specs += [pl.BlockSpec(a.shape, lambda b, c: (0, 0)) for a in ahs]

    out_shapes = tuple(
        jax.ShapeDtypeStruct((B, C, hd[0], hd[2]), dtype) for hd in out_dims)
    out_specs = tuple(
        pl.BlockSpec((None, None, hd[0], hd[2]), lambda b, c: (b, c, 0, 0))
        for hd in out_dims)

    kern = functools.partial(
        _pyramid_kernel, num_scales=len(scales),
        col_off=tuple(col_off), col_width=tuple(col_width))

    call = pl.pallas_call(
        kern,
        out_shape=out_shapes,
        grid_spec=pl.GridSpec(grid=(B, C), in_specs=in_specs, out_specs=out_specs),
        # Per-channel blocks are small; default scoped VMEM (32 MiB) is plenty
        # and stays safe under v7x's 64 MiB physical VMEM.
        compiler_params=pltpu.CompilerParams(
            dimension_semantics=("parallel", "parallel")),
    )

    def run(x):
        outs = call(x, aw_all, *ahs)
        if not isinstance(outs, (tuple, list)):
            outs = (outs,)
        # Strip the lane padding back off (no-op slice when Wout % 128 == 0).
        return tuple(o[..., :hd[1]] for o, hd in zip(outs, out_dims))

    return jax.jit(run), [(hd[0], hd[1]) for hd in out_dims]


def anti_alias_interpolation(x, scale):
    """Pallas equivalent of AntiAliasInterpolation2d.forward (NCHW input)."""
    if float(scale) == 1.0:
        return x                                               # identity, as in torch
    B, C, H, W = x.shape
    fn, _ = _get_pyramid_fn((float(scale),), B, C, H, W, jnp.dtype(x.dtype).name)
    return fn(x)[0]


def image_pyramide(x, scales):
    """Pallas/JAX equivalent of ImagePyramide.forward (non-identity scales fused)."""
    B, C, H, W = x.shape
    ds = tuple(float(s) for s in scales if float(s) != 1.0)
    ds_out = {}
    if ds:
        fn, _ = _get_pyramid_fn(ds, B, C, H, W, jnp.dtype(x.dtype).name)
        for s, o in zip(ds, fn(x)):
            ds_out[s] = o
    out_dict = {}
    for s in scales:
        key = 'prediction_' + str(s).replace('-', '.')         # == 'prediction_' + str(s)
        out_dict[key] = x if float(s) == 1.0 else ds_out[float(s)]
    return out_dict


def _np_reference(x_np, scale):
    """Float64 numpy reference replicating torch pad + depthwise conv2d + nearest ::step."""
    if float(scale) == 1.0:
        return np.asarray(x_np, np.float64)
    g, ksize = _gaussian_1d(scale)
    k2 = np.outer(g, g)
    ka = ksize // 2
    step = int(round(1.0 / scale))
    B, C, H, W = x_np.shape
    Hout, Wout = H // step, W // step
    xpad = np.pad(np.asarray(x_np, np.float64), ((0, 0), (0, 0), (ka, ka), (ka, ka)))
    out = np.zeros((B, C, H, W), np.float64)
    for i in range(ksize):
        for j in range(ksize):
            out += k2[i, j] * xpad[:, :, i:i + H, j:j + W]
    return out[:, :, ::step, ::step][:, :, :Hout, :Wout]


if __name__ == "__main__":
    key = jax.random.PRNGKey(0)
    # num_channels=3 (RGB), small spatial size for the test.
    x = jax.random.normal(key, (2, 3, 16, 16), dtype=jnp.float32)
    scales = [1, 0.5, 0.25]

    out = image_pyramide(x, scales)
    out = jax.block_until_ready(out)

    assert out['prediction_1'].shape == (2, 3, 16, 16)
    assert out['prediction_0.5'].shape == (2, 3, 8, 8)
    assert out['prediction_0.25'].shape == (2, 3, 4, 4)

    x_np = np.asarray(x)
    for s in scales:
        k = 'prediction_' + str(s)
        got = np.asarray(out[k], np.float64)
        ref = _np_reference(x_np, s)
        assert got.shape == ref.shape, (k, got.shape, ref.shape)
        assert np.all(np.isfinite(got))
        err = np.max(np.abs(got - ref))
        assert err < 2e-3, (k, err)

    # bf16 data path: input, matrices and both MXU passes stay bf16 (f32 accum).
    xb = x.astype(jnp.bfloat16)
    out_b = jax.block_until_ready(image_pyramide(xb, scales))
    assert out_b['prediction_0.5'].shape == (2, 3, 8, 8)
    assert out_b['prediction_0.5'].dtype == jnp.bfloat16
    assert np.all(np.isfinite(np.asarray(out_b['prediction_0.25'], np.float32)))

    print("KERNEL_OK")
</pallas_src>

<mosaic_0001>
module attributes {stable_mosaic.version = 11 : i64} {
  func.func @_pyramid_kernel(%arg0: i32, %arg1: i32, %arg2: memref<1x1x16x16xf32, #tpu.memory_space<vmem>>, %arg3: memref<16x256xf32, #tpu.memory_space<vmem>>, %arg4: memref<8x16xf32, #tpu.memory_space<vmem>>, %arg5: memref<4x16xf32, #tpu.memory_space<vmem>>, %arg6: memref<1x1x8x128xf32, #tpu.memory_space<vmem>>, %arg7: memref<1x1x4x128xf32, #tpu.memory_space<vmem>>) attributes {dimension_semantics = [#tpu.dimension_semantics<parallel>, #tpu.dimension_semantics<parallel>], iteration_bounds = array<i64: 2, 3>, scalar_prefetch = 0 : i64, scratch_operands = 0 : i64, tpu.core_type = #tpu.core_type<tc>, window_params = [{transform_indices = @transform_0, window_bounds = array<i64: 1, 1, 16, 16>}, {pipeline_mode = #tpu.pipeline_mode<synchronous>, transform_indices = @transform_1, window_bounds = array<i64: 16, 256>}, {pipeline_mode = #tpu.pipeline_mode<synchronous>, transform_indices = @transform_2, window_bounds = array<i64: 8, 16>}, {pipeline_mode = #tpu.pipeline_mode<synchronous>, transform_indices = @transform_3, window_bounds = array<i64: 4, 16>}, {transform_indices = @transform_4, window_bounds = array<i64: 1, 1, 8, 128>}, {transform_indices = @transform_5, window_bounds = array<i64: 1, 1, 4, 128>}]} {
    %c0 = arith.constant 0 : index
    %c0_0 = arith.constant 0 : index
    %c0_1 = arith.constant 0 : index
    %c0_2 = arith.constant 0 : index
    %0 = vector.load %arg2[%c0, %c0_0, %c0_1, %c0_2] : memref<1x1x16x16xf32, #tpu.memory_space<vmem>>, vector<1x1x16x16xf32>
    %1 = vector.shape_cast %0 : vector<1x1x16x16xf32> to vector<16x16xf32>
    %c0_3 = arith.constant 0 : index
    %c0_4 = arith.constant 0 : index
    %2 = vector.load %arg3[%c0_3, %c0_4] : memref<16x256xf32, #tpu.memory_space<vmem>>, vector<16x256xf32>
    %cst = arith.constant dense<0.000000e+00> : vector<16x256xf32>
    %3 = tpu.matmul %1, %2, %cst {dimension_numbers = #tpu.dot_dimension_numbers<[1], [0], [0], [1], [0, 0, 1, 1], [], []>} : vector<16x16xf32>, vector<16x256xf32>, vector<16x256xf32> -> vector<16x256xf32>
    %4 = vector.extract_strided_slice %3 {offsets = [0, 0], sizes = [16, 128], strides = [1, 1]} : vector<16x256xf32> to vector<16x128xf32>
    %c0_5 = arith.constant 0 : index
    %c0_6 = arith.constant 0 : index
    %5 = vector.load %arg4[%c0_5, %c0_6] : memref<8x16xf32, #tpu.memory_space<vmem>>, vector<8x16xf32>
    %cst_7 = arith.constant dense<0.000000e+00> : vector<8x128xf32>
    %6 = tpu.matmul %5, %4, %cst_7 {dimension_numbers = #tpu.dot_dimension_numbers<[1], [0], [0], [1], [0, 0, 1, 1], [], []>} : vector<8x16xf32>, vector<16x128xf32>, vector<8x128xf32> -> vector<8x128xf32>
    %c0_8 = arith.constant 0 : index
    %c0_9 = arith.constant 0 : index
    %c0_10 = arith.constant 0 : index
    %c0_11 = arith.constant 0 : index
    %7 = vector.load %arg6[%c0_8, %c0_9, %c0_10, %c0_11] : memref<1x1x8x128xf32, #tpu.memory_space<vmem>>, vector<1x1x8x128xf32>
    %8 = vector.shape_cast %7 : vector<1x1x8x128xf32> to vector<8x128xf32>
    %9 = vector.shape_cast %6 : vector<8x128xf32> to vector<1x1x8x128xf32>
    tpu.vector_store %arg6[%c0_8, %c0_9, %c0_10, %c0_11], %9 {strides = array<i32>} : memref<1x1x8x128xf32, #tpu.memory_space<vmem>>, vector<1x1x8x128xf32>,
    %10 = vector.extract_strided_slice %3 {offsets = [0, 128], sizes = [16, 128], strides = [1, 1]} : vector<16x256xf32> to vector<16x128xf32>
    %c0_12 = arith.constant 0 : index
    %c0_13 = arith.constant 0 : index
    %11 = vector.load %arg5[%c0_12, %c0_13] : memref<4x16xf32, #tpu.memory_space<vmem>>, vector<4x16xf32>
    %cst_14 = arith.constant dense<0.000000e+00> : vector<4x128xf32>
    %12 = tpu.matmul %11, %10, %cst_14 {dimension_numbers = #tpu.dot_dimension_numbers<[1], [0], [0], [1], [0, 0, 1, 1], [], []>} : vector<4x16xf32>, vector<16x128xf32>, vector<4x128xf32> -> vector<4x128xf32>
    %c0_15 = arith.constant 0 : index
    %c0_16 = arith.constant 0 : index
    %c0_17 = arith.constant 0 : index
    %c0_18 = arith.constant 0 : index
    %13 = vector.load %arg7[%c0_15, %c0_16, %c0_17, %c0_18] : memref<1x1x4x128xf32, #tpu.memory_space<vmem>>, vector<1x1x4x128xf32>
    %14 = vector.shape_cast %13 : vector<1x1x4x128xf32> to vector<4x128xf32>
    %15 = vector.shape_cast %12 : vector<4x128xf32> to vector<1x1x4x128xf32>
    tpu.vector_store %arg7[%c0_15, %c0_16, %c0_17, %c0_18], %15 {strides = array<i32>} : memref<1x1x4x128xf32, #tpu.memory_space<vmem>>, vector<1x1x4x128xf32>,
    return
  }
  func.func @transform_0(%arg0: i32, %arg1: i32) -> (i32, i32, i32, i32) {
    %c0_i32 = arith.constant 0 : i32
    %c0_i32_0 = arith.constant 0 : i32
    %c0_i32_1 = arith.constant 0 : i32
    return %arg0, %arg1, %c0_i32, %c0_i32_0 : i32, i32, i32, i32
  }
  func.func @transform_1(%arg0: i32, %arg1: i32) -> (i32, i32) {
    %c0_i32 = arith.constant 0 : i32
    %c0_i32_0 = arith.constant 0 : i32
    %c0_i32_1 = arith.constant 0 : i32
    return %c0_i32, %c0_i32_0 : i32, i32
  }
  func.func @transform_2(%arg0: i32, %arg1: i32) -> (i32, i32) {
    %c0_i32 = arith.constant 0 : i32
    %c0_i32_0 = arith.constant 0 : i32
    %c0_i32_1 = arith.constant 0 : i32
    return %c0_i32, %c0_i32_0 : i32, i32
  }
  func.func @transform_3(%arg0: i32, %arg1: i32) -> (i32, i32) {
    %c0_i32 = arith.constant 0 : i32
    %c0_i32_0 = arith.constant 0 : i32
    %c0_i32_1 = arith.constant 0 : i32
    return %c0_i32, %c0_i32_0 : i32, i32
  }
  func.func @transform_4(%arg0: i32, %arg1: i32) -> (i32, i32, i32, i32) {
    %c0_i32 = arith.constant 0 : i32
    %c0_i32_0 = arith.constant 0 : i32
    %c0_i32_1 = arith.constant 0 : i32
    return %arg0, %arg1, %c0_i32, %c0_i32_0 : i32, i32, i32, i32
  }
  func.func @transform_5(%arg0: i32, %arg1: i32) -> (i32, i32, i32, i32) {
    %c0_i32 = arith.constant 0 : i32
    %c0_i32_0 = arith.constant 0 : i32
    %c0_i32_1 = arith.constant 0 : i32
    return %arg0, %arg1, %c0_i32, %c0_i32_0 : i32, i32, i32, i32
  }
}

</mosaic_0001>

<llo_original>
// kernel: run.1
$region0: #{run.1}
  #allocation0 [shape = 'u32[]', space=smem, size = 0x4, offset = 0x4, fixed_abs, tag = 'smem constant byte address 0x4 - core index']
  #allocation1 [shape = 'u32[72,128]{1,0:T(1,128)}', space=vmem, size = 0x9000, scoped, tag = 'internal scratch']
  %s0 = inlined_call_operand.hbm [shape: f32[2,3,16,16], index: 0, kind: input, shape index: {}]
  %s1 = inlined_call_operand.hbm [shape: f32[16,256], index: 1, kind: input, shape index: {}]
  %s2 = inlined_call_operand.hbm [shape: f32[8,16], index: 2, kind: input, shape index: {}]
  %s3 = inlined_call_operand.hbm [shape: f32[4,16], index: 3, kind: input, shape index: {}]
  %s4 = inlined_call_operand.hbm [shape: f32[2,3,8,128], index: 4, kind: output, shape index: {0}]
  %s5 = inlined_call_operand.hbm [shape: f32[2,3,4,128], index: 5, kind: output, shape index: {1}]
  %6 = xla_tuple %s4, %s5
  %s7 = sld [smem:[#allocation0]]
  $region73: #{run.1} parent=0
    _
  %s9 = ssub.s32 1, %s7
  %s10 = scalar_select 0, %s9, %s7
  $region1: #{run.1} parent=0
    #allocation2 [shape = 'u8[16384]{0}', space=vmem, size = 0x4000, scoped, tag = 'input window, operand 0']
    #allocation3 [shape = 's32[2]{0}', space=sflag, size = 0x8, scoped, tag = 'scoped memory for run.1']
    #allocation4 [shape = 's32[2]{0}', space=sflag, size = 0x8, scoped, tag = 'scoped memory for run.1']
    #allocation5 [shape = 'u8[16384]{0}', space=vmem, size = 0x4000, scoped, tag = 'input window, operand 1, single buffered']
    #allocation6 [shape = 's32[1]{0}', space=sflag, size = 0x4, scoped, tag = 'scoped memory for run.1']
    #allocation7 [shape = 'u8[4096]{0}', space=vmem, size = 0x1000, scoped, tag = 'input window, operand 2, single buffered']
    #allocation8 [shape = 'u8[2048]{0}', space=vmem, size = 0x800, scoped, tag = 'input window, operand 3, single buffered']
    #allocation9 [shape = 's32[1]{0}', space=sflag, size = 0x4, scoped, tag = 'scoped memory for run.1']
    #allocation10 [shape = 'u8[8192]{0}', space=vmem, size = 0x2000, scoped, tag = 'output window, operand 0']
    #allocation11 [shape = 'u8[4096]{0}', space=vmem, size = 0x1000, scoped, tag = 'output window, operand 1']
    #allocation12 [shape = 's32[2]{0}', space=sflag, size = 0x8, scoped, tag = 'scoped memory for run.1']
    %11 = vsyncpa [#allocation3], 0
    %s12 = scalar_lea.sflag [#allocation3], 1
    %13 = vsyncpa %s12, 0
    %14 = vsyncpa [#allocation6], 0
    %15 = vsyncpa [#allocation9], 0
    %16 = vsyncpa [#allocation4], 0
    %s17 = scalar_lea.sflag [#allocation4], 1
    %18 = vsyncpa %s17, 0
    %19 = vsyncpa [#allocation12], 0
    %s20 = scalar_lea.sflag [#allocation12], 1
    %21 = vsyncpa %s20, 0
    loop: start=0, step=1, limit=8
    $region2: #{run.1} parent=1 // loop_pre_header
      _
    $region3: #{run.1} parent=1 // loop_header
      %s23 = sphi 0, %s27
      %p24 = scmp.ge.s32.totalorder %s23, 8
      %s30 = sphi 0, %s42
      %s31 = sphi 0, %s38
      %s32 = sphi 0, %s30
      %s33 = sphi 0, %s31
      %s34 = sphi 0, %s32
      %s35 = sphi 0, %s33
      %s47 = sphi 0, %s49
      %s50 = sphi 0, %s47
      %s51 = sphi 0, %s50
      %s67 = sphi 0, %s51
      %s71 = sphi 0, %s71
      %s73 = sphi 0, %s71
      %s74 = sphi 0, %s73
      %s88 = sphi 0, %s74
      %s92 = sphi 0, %s92
      %s94 = sphi 0, %s92
      %s95 = sphi 0, %s94
      %s109 = sphi 0, %s95
      %s113 = sphi 0, %s113
      %s115 = sphi 0, %s113
      %s116 = sphi 0, %s115
      %s130 = sphi 0, %s116
      %s138 = sphi 0, %s140
      %s141 = sphi 0, %s138
      %s142 = sphi 0, %s141
      %s158 = sphi 0, %s142
      %s166 = sphi 0, %s168
      %s169 = sphi 0, %s166
      %s170 = sphi 0, %s169
      %s186 = sphi 0, %s170
    $region4: #{run.1} parent=1 // loop_header_branch
      %26 = sbr.rel (%p24) target = $region8
    $region5: #{run.1} parent=1 // loop_body
      %s28 = ssub.s32 %s23, 1
      %s29 = ssub.s32 %s23, 2
      %s36 = sadd.s32 1, %s31
      %p37 = scmp.ge.s32.totalorder %s36, 3
      %s38 = scalar_select %p37, 0, %s36
      %s39 = sadd.s32 1, %s30
      %s40 = scalar_select %p37, %s39, %s30
      %p41 = scmp.ge.s32.totalorder %s40, 2
      %s42 = scalar_select %p41, 0, %s40
      %s43 = ssub.s32 %s30, %s42
      %s44 = ssub.s32 %s31, %s38
      %s45 = sor.u32 %s43, %s44
      %p46 = scmp.eq.s32.totalorder %s45, 0
      %s48 = sadd.s32 %s47, 1
      %s49 = scalar_select %p46, %s47, %s48
      %p52 = pneg %p46
      %p53 = scmp.eq.s32.totalorder %s23, 5
      %p54 = por %p52, %p53
      %p55 = scmp.ne.s32.totalorder %s47, %s50
      %p56 = scmp.eq.s32.totalorder %s23, 0
      %p57 = por %p55, %p56
      %p58 = scmp.ne.s32.totalorder %s47, %s50
      %p59 = scmp.eq.s32.totalorder %s28, 5
      %p60 = por %p58, %p59
      %p61 = scmp.ne.s32.totalorder %s50, %s51
      %p62 = scmp.eq.s32.totalorder %s28, 0
      %p63 = por %p61, %p62
      %p64 = scmp.ne.s32.totalorder %s50, %s51
      %p65 = scmp.eq.s32.totalorder %s29, 5
      %p66 = por %p64, %p65
      %p68 = scmp.ne.s32.totalorder %s51, %s67
      %p69 = scmp.eq.s32.totalorder %s29, 0
      %p70 = por %p68, %p69
      %s72 = sadd.s32 %s71, 1
      %p75 = scmp.eq.s32.totalorder %s23, 5
      %p76 = scmp.ne.s32.totalorder %s71, %s73
      %p77 = scmp.eq.s32.totalorder %s23, 0
      %p78 = por %p76, %p77
      %p79 = scmp.ne.s32.totalorder %s71, %s73
      %p80 = scmp.eq.s32.totalorder %s28, 5
      %p81 = por %p79, %p80
      %p82 = scmp.ne.s32.totalorder %s73, %s74
      %p83 = scmp.eq.s32.totalorder %s28, 0
      %p84 = por %p82, %p83
      %p85 = scmp.ne.s32.totalorder %s73, %s74
      %p86 = scmp.eq.s32.totalorder %s29, 5
      %p87 = por %p85, %p86
      %p89 = scmp.ne.s32.totalorder %s74, %s88
      %p90 = scmp.eq.s32.totalorder %s29, 0
      %p91 = por %p89, %p90
      %s93 = sadd.s32 %s92, 1
      %p96 = scmp.eq.s32.totalorder %s23, 5
      %p97 = scmp.ne.s32.totalorder %s92, %s94
      %p98 = scmp.eq.s32.totalorder %s23, 0
      %p99 = por %p97, %p98
      %p100 = scmp.ne.s32.totalorder %s92, %s94
      %p101 = scmp.eq.s32.totalorder %s28, 5
      %p102 = por %p100, %p101
      %p103 = scmp.ne.s32.totalorder %s94, %s95
      %p104 = scmp.eq.s32.totalorder %s28, 0
      %p105 = por %p103, %p104
      %p106 = scmp.ne.s32.totalorder %s94, %s95
      %p107 = scmp.eq.s32.totalorder %s29, 5
      %p108 = por %p106, %p107
      %p110 = scmp.ne.s32.totalorder %s95, %s109
      %p111 = scmp.eq.s32.totalorder %s29, 0
      %p112 = por %p110, %p111
      %s114 = sadd.s32 %s113, 1
      %p117 = scmp.eq.s32.totalorder %s23, 5
      %p118 = scmp.ne.s32.totalorder %s113, %s115
      %p119 = scmp.eq.s32.totalorder %s23, 0
      %p120 = por %p118, %p119
      %p121 = scmp.ne.s32.totalorder %s113, %s115
      %p122 = scmp.eq.s32.totalorder %s28, 5
      %p123 = por %p121, %p122
      %p124 = scmp.ne.s32.totalorder %s115, %s116
      %p125 = scmp.eq.s32.totalorder %s28, 0
      %p126 = por %p124, %p125
      %p127 = scmp.ne.s32.totalorder %s115, %s116
      %p128 = scmp.eq.s32.totalorder %s29, 5
      %p129 = por %p127, %p128
      %p131 = scmp.ne.s32.totalorder %s116, %s130
      %p132 = scmp.eq.s32.totalorder %s29, 0
      %p133 = por %p131, %p132
      %s134 = ssub.s32 %s30, %s42
      %s135 = ssub.s32 %s31, %s38
      %s136 = sor.u32 %s134, %s135
      %p137 = scmp.eq.s32.totalorder %s136, 0
      %s139 = sadd.s32 %s138, 1
      %s140 = scalar_select %p137, %s138, %s139
      %p143 = pneg %p137
      %p144 = scmp.eq.s32.totalorder %s23, 5
      %p145 = por %p143, %p144
      %p146 = scmp.ne.s32.totalorder %s138, %s141
      %p147 = scmp.eq.s32.totalorder %s23, 0
      %p148 = por %p146, %p147
      %p149 = scmp.ne.s32.totalorder %s138, %s141
      %p150 = scmp.eq.s32.totalorder %s28, 5
      %p151 = por %p149, %p150
      %p152 = scmp.ne.s32.totalorder %s141, %s142
      %p153 = scmp.eq.s32.totalorder %s28, 0
      %p154 = por %p152, %p153
      %p155 = scmp.ne.s32.totalorder %s141, %s142
      %p156 = scmp.eq.s32.totalorder %s29, 5
      %p157 = por %p155, %p156
      %p159 = scmp.ne.s32.totalorder %s142, %s158
      %p160 = scmp.eq.s32.totalorder %s29, 0
      %p161 = por %p159, %p160
      %s162 = ssub.s32 %s30, %s42
      %s163 = ssub.s32 %s31, %s38
      %s164 = sor.u32 %s162, %s163
      %p165 = scmp.eq.s32.totalorder %s164, 0
      %s167 = sadd.s32 %s166, 1
      %s168 = scalar_select %p165, %s166, %s167
      %p171 = pneg %p165
      %p172 = scmp.eq.s32.totalorder %s23, 5
      %p173 = por %p171, %p172
      %p174 = scmp.ne.s32.totalorder %s166, %s169
      %p175 = scmp.eq.s32.totalorder %s23, 0
      %p176 = por %p174, %p175
      %p177 = scmp.ne.s32.totalorder %s166, %s169
      %p178 = scmp.eq.s32.totalorder %s28, 5
      %p179 = por %p177, %p178
      %p180 = scmp.ne.s32.totalorder %s169, %s170
      %p181 = scmp.eq.s32.totalorder %s28, 0
      %p182 = por %p180, %p181
      %p183 = scmp.ne.s32.totalorder %s169, %s170
      %p184 = scmp.eq.s32.totalorder %s29, 5
      %p185 = por %p183, %p184
      %p187 = scmp.ne.s32.totalorder %s170, %s186
      %p188 = scmp.eq.s32.totalorder %s29, 0
      %p189 = por %p187, %p188
      %p190 = scmp.le.s32.totalorder 1, %s23
      %p191 = scmp.lt.s32.totalorder %s23, 7
      %p192 = pnand %p190, %p191
      %p193 = pneg %p192
      // Predicated region
      $region9: #{run.1} parent=5 // pred_check
        _
      $region10: #{run.1} parent=5 // pred_check_branch
        %195 = sbr.rel (%p192) target = $region12
      $region11: #{run.1} parent=5 // pred_region
        %s196 = ssub.s32 %s23, 1
        // Predicated region
        $region13: #{run.1} parent=11 // pred_check
          %p197 = pneg %p84
        $region14: #{run.1} parent=11 // pred_check_branch
          %199 = sbr.rel (%p197) target = $region16
        $region15: #{run.1} parent=11 // pred_region
          %201 = vsyncadd [#allocation6], 0
          %s202 = sshll.u32 %s1, 4
          %s203 = int_to_ptr.hbm [resolvable:$true] %s202
          %s204 = sshll.u32 [#allocation5], 4
          %s205 = int_to_ptr.vmem [resolvable:$true] %s204
          %210 = dma.hbm_to_vmem [thread:$0]  %s203, 512, %s205, [#allocation6], 256, 256, 16
        $region16: #{run.1} parent=11 // pred_fallthru
          _
        // Predicated region
        $region17: #{run.1} parent=11 // pred_check
          %p211 = pneg %p105
        $region18: #{run.1} parent=11 // pred_check_branch
          %213 = sbr.rel (%p211) target = $region20
        $region19: #{run.1} parent=11 // pred_region
          %215 = vsyncadd [#allocation6], 0
          %s217 = sshll.u32 %s2, 4
          %s218 = int_to_ptr.hbm [resolvable:$true] %s217
          %s219 = sshll.u32 [#allocation7], 4
          %s220 = int_to_ptr.vmem [resolvable:$true] %s219
          %222 = dma.hbm_to_vmem [thread:$0]  %s218, 128, %s220, [#allocation6]
        $region20: #{run.1} parent=11 // pred_fallthru
          _
        // Predicated region
        $region21: #{run.1} parent=11 // pred_check
          %p223 = pneg %p126
        $region22: #{run.1} parent=11 // pred_check_branch
          %225 = sbr.rel (%p223) target = $region24
        $region23: #{run.1} parent=11 // pred_region
          %227 = vsyncadd [#allocation9], 0
          %s229 = sshll.u32 %s3, 4
          %s230 = int_to_ptr.hbm [resolvable:$true] %s229
          %s231 = sshll.u32 [#allocation8], 4
          %s232 = int_to_ptr.vmem [resolvable:$true] %s231
          %234 = dma.hbm_to_vmem [thread:$0]  %s230, 64, %s232, [#allocation9]
        $region24: #{run.1} parent=11 // pred_fallthru
          _
      $region12: #{run.1} parent=5 // pred_fallthru
        _
      %p235 = scmp.lt.s32.totalorder %s23, 6
      // Predicated region
      $region25: #{run.1} parent=5 // pred_check
        %p236 = pneg %p235
      $region26: #{run.1} parent=5 // pred_check_branch
        %238 = sbr.rel (%p236) target = $region28
      $region27: #{run.1} parent=5 // pred_region
        // Predicated region
        $region29: #{run.1} parent=27 // pred_check
          %p239 = pneg %p57
        $region30: #{run.1} parent=27 // pred_check_branch
          %241 = sbr.rel (%p239) target = $region32
        $region31: #{run.1} parent=27 // pred_region
          %s242 = sand.u32 %s47, 1
          %s243 = scalar_lea.sflag [#allocation3], %s242
          %s244 = sand.u32 %s47, 1
          %s245 = smul.addr %s244, 16
          %s246 = scalar_lea.vmem [#allocation2], %s245
          %248 = vsyncadd %s243, 0
          %s249 = smul.addr %s31, 2
          %s250 = smul.addr %s30, 6
          %s251 = sadd.s32 %s249, %s250
          %s252 = smul.addr %s251, 8
          %s253 = scalar_lea.hbm %s0, %s252
          %s254 = sshll.u32 %s253, 4
          %s255 = int_to_ptr.hbm [resolvable:$true] %s254
          %s256 = sshll.u32 %s246, 4
          %s257 = int_to_ptr.vmem [resolvable:$true] %s256
          %262 = dma.hbm_to_vmem [thread:$0]  %s255, 256, %s257, %s243, 128, 128, 8
        $region32: #{run.1} parent=27 // pred_fallthru
          _
      $region28: #{run.1} parent=5 // pred_fallthru
        _
      %p263 = scmp.le.s32.totalorder 1, %s23
      %p264 = scmp.lt.s32.totalorder %s23, 7
      %p265 = pnand %p263, %p264
      %p266 = pneg %p265
      // Predicated region
      $region33: #{run.1} parent=5 // pred_check
        _
      $region34: #{run.1} parent=5 // pred_check_branch
        %268 = sbr.rel (%p265) target = $region36
      $region35: #{run.1} parent=5 // pred_region
        %s269 = ssub.s32 %s23, 1
        %s270 = sand.u32 %s50, 1
        %s271 = scalar_lea.sflag [#allocation3], %s270
        %s272 = sand.u32 %s50, 1
        %s273 = smul.addr %s272, 16
        %s274 = scalar_lea.vmem [#allocation2], %s273
        // Predicated region
        $region37: #{run.1} parent=35 // pred_check
          %p275 = pneg %p63
        $region38: #{run.1} parent=35 // pred_check_branch
          %277 = sbr.rel (%p275) target = $region40
        $region39: #{run.1} parent=35 // pred_region
          %279 = dma.done %s271, 256
        $region40: #{run.1} parent=35 // pred_fallthru
          _
        // Predicated region
        $region41: #{run.1} parent=35 // pred_check
          %p280 = pneg %p84
        $region42: #{run.1} parent=35 // pred_check_branch
          %282 = sbr.rel (%p280) target = $region44
        $region43: #{run.1} parent=35 // pred_region
          %284 = dma.done [#allocation6], 512
        $region44: #{run.1} parent=35 // pred_fallthru
          _
        // Predicated region
        $region45: #{run.1} parent=35 // pred_check
          %p285 = pneg %p105
        $region46: #{run.1} parent=35 // pred_check_branch
          %287 = sbr.rel (%p285) target = $region48
        $region47: #{run.1} parent=35 // pred_region
          %289 = dma.done [#allocation6], 128
        $region48: #{run.1} parent=35 // pred_fallthru
          _
        // Predicated region
        $region49: #{run.1} parent=35 // pred_check
          %p290 = pneg %p126
        $region50: #{run.1} parent=35 // pred_check_branch
          %292 = sbr.rel (%p290) target = $region52
        $region51: #{run.1} parent=35 // pred_region
          %294 = dma.done [#allocation9], 64
        $region52: #{run.1} parent=35 // pred_fallthru
          _
        %s295 = sand.u32 %s50, 1
        %s296 = scalar_lea.sflag [#allocation3], %s295
        %s297 = sand.u32 %s50, 1
        %s298 = smul.addr %s297, 16
        %s299 = scalar_lea.vmem [#allocation2], %s298
        %p300 = pneg %p63
        %p301 = pneg %p60
        %p302 = pneg %p84
        %p303 = pneg %p81
        %p304 = pneg %p105
        %p305 = pneg %p102
        %p306 = pneg %p126
        %p307 = pneg %p123
        %p308 = pneg %p154
        %p309 = pneg %p151
        %s310 = sand.u32 %s141, 1
        %s311 = scalar_lea.sflag [#allocation4], %s310
        %s312 = sand.u32 %s141, 1
        %s313 = smul.addr %s312, 8
        %s314 = scalar_lea.vmem [#allocation10], %s313
        %p315 = pneg %p182
        %p316 = pneg %p179
        %s317 = sand.u32 %s169, 1
        %s318 = scalar_lea.sflag [#allocation12], %s317
        %s319 = sand.u32 %s169, 1
        %s320 = smul.addr %s319, 4
        %s321 = scalar_lea.vmem [#allocation11], %s320
        %v322 = vld [vmem:[%s274] sm:$0xff]
        %v323 = vld [vmem:[%s274 + $0x8] sm:$0xff]
        %v324 = vld [vmem:[#allocation5] sm:$0xff]
        %v325 = vld [vmem:[#allocation5 + $0x8] sm:$0xff]
        %v326 = vld [vmem:[#allocation5 + $0x10] sm:$0xff]
        %v327 = vld [vmem:[#allocation5 + $0x18] sm:$0xff]
        %vm328 = vcmask 130048
        %v330 = vsel %vm328, %v322, 0
        %v333 = vsel %vm328, %v323, 0
        %335 = vmatpush.msra.mxu0 0.0
        %336 = vmatpush.msra.mxu0 0.0
        %337 = vmatpush.msra.mxu0 0.0
        %338 = vmatpush.msra.mxu0 0.0
        %339 = vmatpush.msra.mxu0 0.0
        %340 = vmatpush.msra.mxu0 0.0
        %341 = vmatpush.msra.mxu0 0.0
        %342 = vmatpush.msra.mxu0 0.0
        %343 = vmatpush.msra.mxu0 0.0
        %344 = vmatpush.msra.mxu0 0.0
        %345 = vmatpush.msra.mxu0 0.0
        %346 = vmatpush.msra.mxu0 0.0
        %347 = vmatpush.msra.mxu0 0.0
        %348 = vmatpush.msra.mxu0 0.0
        %349 = vmatpush.msra.mxu0 %v326
        %350 = vmatpush.msra.mxu0 %v324
        %351 = vmatmul.f32.gmra.mxu0 %v330
        %v352 = vpop.f32.mrf.mxu0
        %v353 = vadd.f32 0.0, %v352
        %354 = vmatmul.f32.gmra.mxu0 %v333
        %v355 = vpop.f32.mrf.mxu0
        %v356 = vadd.f32 0.0, %v355
        %357 = vdwg.mxu0
        %358 = vmatpush.msra.mxu0 0.0
        %359 = vmatpush.msra.mxu0 0.0
        %360 = vmatpush.msra.mxu0 0.0
        %361 = vmatpush.msra.mxu0 0.0
        %362 = vmatpush.msra.mxu0 0.0
        %363 = vmatpush.msra.mxu0 0.0
        %364 = vmatpush.msra.mxu0 0.0
        %365 = vmatpush.msra.mxu0 0.0
        %366 = vmatpush.msra.mxu0 0.0
        %367 = vmatpush.msra.mxu0 0.0
        %368 = vmatpush.msra.mxu0 0.0
        %369 = vmatpush.msra.mxu0 0.0
        %370 = vmatpush.msra.mxu0 0.0
        %371 = vmatpush.msra.mxu0 0.0
        %372 = vmatpush.msra.mxu0 %v327
        %373 = vmatpush.msra.mxu0 %v325
        %374 = vmatmul.f32.gmra.mxu0 %v330
        %v375 = vpop.f32.mrf.mxu0
        %v376 = vadd.f32 0.0, %v375
        %377 = vmatmul.f32.gmra.mxu0 %v333
        %v378 = vpop.f32.mrf.mxu0
        %v379 = vadd.f32 0.0, %v378
        %380 = vdwg.mxu0
        %v381 = vld [vmem:[#allocation7] sm:$0xff]
        %v383 = vsel %vm328, %v381, 0
        %385 = vmatpush.msra.mxu0 0.0
        %386 = vmatpush.msra.mxu0 0.0
        %387 = vmatpush.msra.mxu0 0.0
        %388 = vmatpush.msra.mxu0 0.0
        %389 = vmatpush.msra.mxu0 0.0
        %390 = vmatpush.msra.mxu0 0.0
        %391 = vmatpush.msra.mxu0 0.0
        %392 = vmatpush.msra.mxu0 0.0
        %393 = vmatpush.msra.mxu0 0.0
        %394 = vmatpush.msra.mxu0 0.0
        %395 = vmatpush.msra.mxu0 0.0
        %396 = vmatpush.msra.mxu0 0.0
        %397 = vmatpush.msra.mxu0 0.0
        %398 = vmatpush.msra.mxu0 0.0
        %399 = vmatpush.msra.mxu0 %v356
        %400 = vmatpush.msra.mxu0 %v353
        %401 = vmatmul.f32.gmra.mxu0 %v383
        %v402 = vpop.f32.mrf.mxu0
        %v403 = vadd.f32 0.0, %v402
        %404 = vdwg.mxu0
        %405 = vst [vmem:[%s314] sm:$0xff] %v403
        %v406 = vld [vmem:[#allocation8] sm:$0xf]
        %v408 = vsel %vm328, %v406, 0
        %410 = vmatpush.msra.mxu0 0.0
        %411 = vmatpush.msra.mxu0 0.0
        %412 = vmatpush.msra.mxu0 0.0
        %413 = vmatpush.msra.mxu0 0.0
        %414 = vmatpush.msra.mxu0 0.0
        %415 = vmatpush.msra.mxu0 0.0
        %416 = vmatpush.msra.mxu0 0.0
        %417 = vmatpush.msra.mxu0 0.0
        %418 = vmatpush.msra.mxu0 0.0
        %419 = vmatpush.msra.mxu0 0.0
        %420 = vmatpush.msra.mxu0 0.0
        %421 = vmatpush.msra.mxu0 0.0
        %422 = vmatpush.msra.mxu0 0.0
        %423 = vmatpush.msra.mxu0 0.0
        %424 = vmatpush.msra.mxu0 %v379
        %425 = vmatpush.msra.mxu0 %v376
        %426 = vmatmul.f32.gmra.mxu0 %v408
        %v427 = vpop.f32.mrf.mxu0
        %v428 = vadd.f32 0.0, %v427
        %429 = vdwg.mxu0
        %430 = vst [vmem:[%s321] sm:$0xf] %v428
        %s431 = sand.u32 %s141, 1
        %s432 = scalar_lea.sflag [#allocation4], %s431
        %s433 = sand.u32 %s141, 1
        %s434 = smul.addr %s433, 8
        %s435 = scalar_lea.vmem [#allocation10], %s434
        %s436 = sand.u32 %s169, 1
        %s437 = scalar_lea.sflag [#allocation12], %s436
        %s438 = sand.u32 %s169, 1
        %s439 = smul.addr %s438, 4
        %s440 = scalar_lea.vmem [#allocation11], %s439
        // Predicated region
        $region53: #{run.1} parent=35 // pred_check
          %p441 = pneg %p151
        $region54: #{run.1} parent=35 // pred_check_branch
          %443 = sbr.rel (%p441) target = $region56
        $region55: #{run.1} parent=35 // pred_region
          %445 = vsyncadd %s432, 0
          %s446 = smul.addr %s32, 3
          %s447 = sadd.s32 %s33, %s446
          %s448 = smul.addr %s447, 8
          %s449 = scalar_lea.hbm %s4, %s448
          %s451 = sshll.u32 %s435, 4
          %s452 = int_to_ptr.vmem [resolvable:$true] %s451
          %s453 = sshll.u32 %s449, 4
          %s454 = int_to_ptr.hbm [resolvable:$true] %s453
          %456 = dma.vmem_to_hbm [thread:$0]  %s452, 128, %s454, %s432
        $region56: #{run.1} parent=35 // pred_fallthru
          _
        // Predicated region
        $region57: #{run.1} parent=35 // pred_check
          %p457 = pneg %p179
        $region58: #{run.1} parent=35 // pred_check_branch
          %459 = sbr.rel (%p457) target = $region60
        $region59: #{run.1} parent=35 // pred_region
          %461 = vsyncadd %s437, 0
          %s462 = smul.addr %s32, 3
          %s463 = sadd.s32 %s33, %s462
          %s464 = smul.addr %s463, 4
          %s465 = scalar_lea.hbm %s5, %s464
          %s467 = sshll.u32 %s440, 4
          %s468 = int_to_ptr.vmem [resolvable:$true] %s467
          %s469 = sshll.u32 %s465, 4
          %s470 = int_to_ptr.hbm [resolvable:$true] %s469
          %472 = dma.vmem_to_hbm [thread:$0]  %s468, 64, %s470, %s437
        $region60: #{run.1} parent=35 // pred_fallthru
          _
      $region36: #{run.1} parent=5 // pred_fallthru
        _
      %p473 = scmp.le.s32.totalorder 2, %s23
      // Predicated region
      $region61: #{run.1} parent=5 // pred_check
        %p474 = pneg %p473
      $region62: #{run.1} parent=5 // pred_check_branch
        %476 = sbr.rel (%p474) target = $region64
      $region63: #{run.1} parent=5 // pred_region
        %s477 = ssub.s32 %s23, 2
        // Predicated region
        $region65: #{run.1} parent=63 // pred_check
          %p478 = pneg %p157
        $region66: #{run.1} parent=63 // pred_check_branch
          %480 = sbr.rel (%p478) target = $region68
        $region67: #{run.1} parent=63 // pred_region
          %s481 = sand.u32 %s142, 1
          %s482 = scalar_lea.sflag [#allocation4], %s481
          %s483 = sand.u32 %s142, 1
          %s484 = smul.addr %s483, 8
          %s485 = scalar_lea.vmem [#allocation10], %s484
          %487 = dma.done %s482, 128
        $region68: #{run.1} parent=63 // pred_fallthru
          _
        // Predicated region
        $region69: #{run.1} parent=63 // pred_check
          %p488 = pneg %p185
        $region70: #{run.1} parent=63 // pred_check_branch
          %490 = sbr.rel (%p488) target = $region72
        $region71: #{run.1} parent=63 // pred_region
          %s491 = sand.u32 %s170, 1
          %s492 = scalar_lea.sflag [#allocation12], %s491
          %s493 = sand.u32 %s170, 1
          %s494 = smul.addr %s493, 4
          %s495 = scalar_lea.vmem [#allocation11], %s494
          %497 = dma.done %s492, 64
        $region72: #{run.1} parent=63 // pred_fallthru
          _
      $region64: #{run.1} parent=5 // pred_fallthru
        _
    $region6: #{run.1} parent=1 // loop_footer
      %s27 = sadd.s32 1, %s23
    $region7: #{run.1} parent=1 // loop_footer_branch
      %22 = sbr.rel target = $region3
    $region8: #{run.1} parent=1 // loop_exit
      _
    %498 = vsyncpa [#allocation3], 1
    %s499 = scalar_lea.sflag [#allocation3], 1
    %500 = vsyncpa %s499, 1
    %501 = vsyncpa [#allocation6], 1
    %502 = vsyncpa [#allocation9], 1
    %503 = vsyncpa [#allocation4], 1
    %s504 = scalar_lea.sflag [#allocation4], 1
    %505 = vsyncpa %s504, 1
    %506 = vsyncpa [#allocation12], 1
    %s507 = scalar_lea.sflag [#allocation12], 1
    %508 = vsyncpa %s507, 1

</llo_original>
